<compile_context>
chip_gen: v5e
topology: v5e:2x2
jax: 0.10.0
libtpu: 0.0.40
codegen_flags: <defaults>
</compile_context>

<pallas_src>
import jax
import jax.numpy as jnp
from jax.experimental import pallas as pl
from jax.experimental.pallas import tpu as pltpu


def _disp_regression_kernel(x_ref, o_ref):
    # x_ref: (D, tH, tW) one spatial tile, full disparity axis.
    # o_ref: (tH, tW)
    D = x_ref.shape[0]
    if D < 128:
        # Fully unrolled scalar-weight MAC; k == 0 contributes nothing (weight 0).
        acc = jnp.zeros(o_ref.shape, dtype=jnp.float32)
        for k in range(1, D):
            acc = acc + x_ref[k].astype(jnp.float32) * float(k)
    else:
        # Large disparity counts: bound the instruction stream / compile time while
        # keeping enough ILP for the VALU.  Wall-clock neutral (compute hides under DMA).
        def body(k, acc):
            return acc + x_ref[k].astype(jnp.float32) * k.astype(jnp.float32)

        acc = jax.lax.fori_loop(
            1, D, body, jnp.zeros(o_ref.shape, dtype=jnp.float32), unroll=8
        )
    o_ref[...] = acc.astype(o_ref.dtype)


def _physical_vmem_bytes() -> int:
    try:
        return int(pltpu.get_tpu_info().vmem_capacity_bytes)
    except Exception:
        return 64 << 20  # conservative: v7x-sized VMEM


def _pick_tiles(D, H, W, itemsize, per_buffer_budget_bytes):
    """Pick (tH, tW) for one x tile (D*tH*tW*itemsize bytes), preferring full width.

    Tiles respect the TPU (8, 128) constraint: each of the last two block dims is
    either the full array extent or a multiple of 8 / 128 respectively (partial
    trailing blocks are handled by Pallas padding + masked writes).
    """
    # Prefer tW = W: each per-d slab of the tile is one contiguous HBM run.
    tW = W
    row_bytes = D * tW * itemsize  # bytes contributed by one H-row of the tile
    max_rows = per_buffer_budget_bytes // row_bytes
    if max_rows >= H:
        return H, tW
    if max_rows >= 8:
        return int((max_rows // 8) * 8), tW
    # Even 8 full-width rows exceed the budget (huge D*W): split W instead.
    tH = min(8, H)
    max_lanes = per_buffer_budget_bytes // (D * tH * itemsize)
    if max_lanes >= W:
        return tH, W
    tW = int(max(128, (max_lanes // 128) * 128))
    return tH, tW


def disparity_regression(x: jax.Array, maxdisp: int) -> jax.Array:
    """Equivalent of torch.sum(x * arange(maxdisp)[None,:,None,None], dim=1, keepdim=True)."""
    B, D, H, W = x.shape
    assert D == maxdisp, f"channel dim {D} must equal maxdisp {maxdisp}"

    itemsize = jnp.dtype(x.dtype).itemsize
    phys_vmem = _physical_vmem_bytes()

    # One x buffer gets ~1/4 of physical VMEM, capped at 20 MiB:
    #   v7x (64 MiB)  -> 16 MiB per buffer, 2 in-buffers = 32 MiB (<= ~56 MiB total).
    #   v5e/v6e (128) -> 20 MiB per buffer; plenty of headroom.
    per_buffer_budget = min(20 << 20, phys_vmem // 4)
    tH, tW = _pick_tiles(D, H, W, itemsize, per_buffer_budget)

    # Keep enough grid steps for v7x's 2 TensorCores to both get work: shrink tH
    # (towards the 8-sublane floor) if large tiles collapsed the grid too far.
    def _steps(th, tw):
        return B * pl.cdiv(H, th) * pl.cdiv(W, tw)

    while _steps(tH, tW) < 4 and tH > 8:
        new_tH = max(8, ((tH // 2) // 8) * 8)
        if new_tH == tH:
            break
        tH = new_tH

    grid = (B, pl.cdiv(H, tH), pl.cdiv(W, tW))

    # Exact double-buffer need: 2 x-tiles + 2 out-tiles, plus a small margin for
    # Mosaic internal scratch.  Never a fixed cap that could under-provision.
    x_tile_bytes = D * tH * tW * itemsize
    out_tile_bytes = tH * tW * itemsize
    vmem_limit = int(2 * x_tile_bytes + 2 * out_tile_bytes + (4 << 20))
    vmem_limit = max(vmem_limit, 16 << 20)  # never below the smallest scoped default

    cost = pl.CostEstimate(
        flops=2 * B * D * H * W,
        transcendentals=0,
        bytes_accessed=B * D * H * W * itemsize + B * H * W * itemsize,
    )

    return pl.pallas_call(
        _disp_regression_kernel,
        out_shape=jax.ShapeDtypeStruct((B, 1, H, W), x.dtype),
        grid_spec=pltpu.PrefetchScalarGridSpec(
            num_scalar_prefetch=0,
            grid=grid,
            in_specs=[
                # Squeeze the batch dim; keep the full D axis in every block.
                pl.BlockSpec((None, D, tH, tW), lambda b, h, w: (b, 0, h, w)),
            ],
            # Squeeze batch and the size-1 channel dim -> lane-dense (tH, tW) output.
            out_specs=pl.BlockSpec((None, None, tH, tW), lambda b, h, w: (b, 0, h, w)),
        ),
        compiler_params=pltpu.CompilerParams(
            dimension_semantics=("parallel", "parallel", "parallel"),
            vmem_limit_bytes=vmem_limit,
        ),
        cost_estimate=cost,
    )(x)


if __name__ == "__main__":
    key = jax.random.PRNGKey(0)
    B, maxdisp, H, W = 2, 4, 16, 128  # small shapes; W=128 keeps the output lane-dense

    # x is typically a softmax over disparities in the surrounding network;
    # reproduce that to get realistic values (any values work for the kernel).
    logits = jax.random.normal(key, (B, maxdisp, H, W), dtype=jnp.float32)
    x = jax.nn.softmax(logits, axis=1)

    out = disparity_regression(x, maxdisp)
    out = jax.block_until_ready(out)

    # Reference check against plain JAX semantics of the PyTorch forward.
    disp = jnp.arange(maxdisp, dtype=x.dtype).reshape(1, maxdisp, 1, 1)
    ref = jnp.sum(x * disp, axis=1, keepdims=True)
    assert out.shape == (B, 1, H, W)
    assert jnp.allclose(out, ref, atol=1e-5, rtol=1e-5), "mismatch vs reference"

    print("KERNEL_OK")
</pallas_src>

<mosaic_0001>
module attributes {stable_mosaic.version = 11 : i64} {
  func.func @_disp_regression_kernel(%arg0: i32, %arg1: i32, %arg2: i32, %arg3: memref<1x4x8x128xf32, #tpu.memory_space<vmem>>, %arg4: memref<1x1x8x128xf32, #tpu.memory_space<vmem>>) attributes {dimension_semantics = [#tpu.dimension_semantics<parallel>, #tpu.dimension_semantics<parallel>, #tpu.dimension_semantics<parallel>], iteration_bounds = array<i64: 2, 2, 1>, scalar_prefetch = 0 : i64, scratch_operands = 0 : i64, tpu.core_type = #tpu.core_type<tc>, window_params = [{transform_indices = @transform_0, window_bounds = array<i64: 1, 4, 8, 128>}, {transform_indices = @transform_1, window_bounds = array<i64: 1, 1, 8, 128>}]} {
    %cst = arith.constant 0.000000e+00 : f32
    %0 = vector.broadcast %cst : f32 to vector<8x128xf32>
    %c0 = arith.constant 0 : index
    %c1 = arith.constant 1 : index
    %c0_0 = arith.constant 0 : index
    %c0_1 = arith.constant 0 : index
    %1 = vector.load %arg3[%c0, %c1, %c0_0, %c0_1] : memref<1x4x8x128xf32, #tpu.memory_space<vmem>>, vector<1x1x8x128xf32>
    %2 = vector.shape_cast %1 : vector<1x1x8x128xf32> to vector<8x128xf32>
    %cst_2 = arith.constant 1.000000e+00 : f32
    %3 = vector.broadcast %cst_2 : f32 to vector<8x128xf32>
    %4 = arith.mulf %2, %3 : vector<8x128xf32>
    %5 = arith.addf %0, %4 : vector<8x128xf32>
    %c0_3 = arith.constant 0 : index
    %c2 = arith.constant 2 : index
    %c0_4 = arith.constant 0 : index
    %c0_5 = arith.constant 0 : index
    %6 = vector.load %arg3[%c0_3, %c2, %c0_4, %c0_5] : memref<1x4x8x128xf32, #tpu.memory_space<vmem>>, vector<1x1x8x128xf32>
    %7 = vector.shape_cast %6 : vector<1x1x8x128xf32> to vector<8x128xf32>
    %cst_6 = arith.constant 2.000000e+00 : f32
    %8 = vector.broadcast %cst_6 : f32 to vector<8x128xf32>
    %9 = arith.mulf %7, %8 : vector<8x128xf32>
    %10 = arith.addf %5, %9 : vector<8x128xf32>
    %c0_7 = arith.constant 0 : index
    %c3 = arith.constant 3 : index
    %c0_8 = arith.constant 0 : index
    %c0_9 = arith.constant 0 : index
    %11 = vector.load %arg3[%c0_7, %c3, %c0_8, %c0_9] : memref<1x4x8x128xf32, #tpu.memory_space<vmem>>, vector<1x1x8x128xf32>
    %12 = vector.shape_cast %11 : vector<1x1x8x128xf32> to vector<8x128xf32>
    %cst_10 = arith.constant 3.000000e+00 : f32
    %13 = vector.broadcast %cst_10 : f32 to vector<8x128xf32>
    %14 = arith.mulf %12, %13 : vector<8x128xf32>
    %15 = arith.addf %10, %14 : vector<8x128xf32>
    %c0_11 = arith.constant 0 : index
    %c0_12 = arith.constant 0 : index
    %c0_13 = arith.constant 0 : index
    %c0_14 = arith.constant 0 : index
    %16 = vector.load %arg4[%c0_11, %c0_12, %c0_13, %c0_14] : memref<1x1x8x128xf32, #tpu.memory_space<vmem>>, vector<1x1x8x128xf32>
    %17 = vector.shape_cast %16 : vector<1x1x8x128xf32> to vector<8x128xf32>
    %18 = vector.shape_cast %15 : vector<8x128xf32> to vector<1x1x8x128xf32>
    tpu.vector_store %arg4[%c0_11, %c0_12, %c0_13, %c0_14], %18 {strides = array<i32>} : memref<1x1x8x128xf32, #tpu.memory_space<vmem>>, vector<1x1x8x128xf32>,
    return
  }
  func.func @transform_0(%arg0: i32, %arg1: i32, %arg2: i32) -> (i32, i32, i32, i32) {
    %c0_i32 = arith.constant 0 : i32
    %c0_i32_0 = arith.constant 0 : i32
    return %arg0, %c0_i32, %arg1, %arg2 : i32, i32, i32, i32
  }
  func.func @transform_1(%arg0: i32, %arg1: i32, %arg2: i32) -> (i32, i32, i32, i32) {
    %c0_i32 = arith.constant 0 : i32
    %c0_i32_0 = arith.constant 0 : i32
    return %arg0, %c0_i32, %arg1, %arg2 : i32, i32, i32, i32
  }
}

</mosaic_0001>

<llo_original>
// kernel: tpu_custom_call.1
$region0: #{tpu_custom_call.1}
  #allocation0 [shape = 'u32[]', space=smem, size = 0x4, offset = 0x4, fixed_abs, tag = 'smem constant byte address 0x4 - core index']
  #allocation1 [shape = 'u32[72,128]{1,0:T(1,128)}', space=vmem, size = 0x9000, scoped, tag = 'internal scratch']
  %s0 = inlined_call_operand.hbm [shape: f32[2,4,16,128], index: 0, kind: input, shape index: {}]
  %s1 = inlined_call_operand.hbm [shape: f32[2,1,16,128], index: 1, kind: output, shape index: {}]
  %s2 = sld [smem:[#allocation0]]
  $region41: #{tpu_custom_call.1} parent=0
    _
  %s4 = ssub.s32 1, %s2
  %s5 = scalar_select 0, %s4, %s2
  $region1: #{tpu_custom_call.1} parent=0
    #allocation2 [shape = 'u8[32768]{0}', space=vmem, size = 0x8000, scoped, tag = 'input window, operand 0']
    #allocation3 [shape = 's32[2]{0}', space=sflag, size = 0x8, scoped, tag = 'scoped memory for tpu_custom_call.1']
    #allocation4 [shape = 's32[2]{0}', space=sflag, size = 0x8, scoped, tag = 'scoped memory for tpu_custom_call.1']
    #allocation5 [shape = 'u8[8192]{0}', space=vmem, size = 0x2000, scoped, tag = 'output window, operand 0']
    %6 = vsyncpa [#allocation3], 0
    %s7 = scalar_lea.sflag [#allocation3], 1
    %8 = vsyncpa %s7, 0
    %9 = vsyncpa [#allocation4], 0
    %s10 = scalar_lea.sflag [#allocation4], 1
    %11 = vsyncpa %s10, 0
    loop: start=0, step=1, limit=6
    $region2: #{tpu_custom_call.1} parent=1 // loop_pre_header
      _
    $region3: #{tpu_custom_call.1} parent=1 // loop_header
      %s13 = sphi 0, %s17
      %p14 = scmp.ge.s32.totalorder %s13, 6
      %s20 = sphi 0, %s39
      %s21 = sphi 0, %s35
      %s22 = sphi 0, %s31
      %s23 = sphi 0, %s20
      %s24 = sphi 0, %s21
      %s25 = sphi 0, %s22
      %s26 = sphi 0, %s23
      %s27 = sphi 0, %s24
      %s28 = sphi 0, %s25
      %s46 = sphi 0, %s48
      %s49 = sphi 0, %s46
      %s50 = sphi 0, %s49
      %s66 = sphi 0, %s50
      %s76 = sphi 0, %s78
      %s79 = sphi 0, %s76
      %s80 = sphi 0, %s79
      %s96 = sphi 0, %s80
    $region4: #{tpu_custom_call.1} parent=1 // loop_header_branch
      %16 = sbr.rel (%p14) target = $region8
    $region5: #{tpu_custom_call.1} parent=1 // loop_body
      %s18 = ssub.s32 %s13, 1
      %s19 = ssub.s32 %s13, 2
      %s29 = sadd.s32 1, %s22
      %p30 = scmp.ge.s32.totalorder %s29, 1
      %s31 = scalar_select %p30, 0, %s29
      %s32 = sadd.s32 1, %s21
      %s33 = scalar_select %p30, %s32, %s21
      %p34 = scmp.ge.s32.totalorder %s33, 2
      %s35 = scalar_select %p34, 0, %s33
      %s36 = sadd.s32 1, %s20
      %s37 = scalar_select %p34, %s36, %s20
      %p38 = scmp.ge.s32.totalorder %s37, 2
      %s39 = scalar_select %p38, 0, %s37
      %s40 = ssub.s32 %s20, %s39
      %s41 = ssub.s32 %s21, %s35
      %s42 = sor.u32 %s40, %s41
      %s43 = ssub.s32 %s22, %s31
      %s44 = sor.u32 %s42, %s43
      %p45 = scmp.eq.s32.totalorder %s44, 0
      %s47 = sadd.s32 %s46, 1
      %s48 = scalar_select %p45, %s46, %s47
      %p51 = pneg %p45
      %p52 = scmp.eq.s32.totalorder %s13, 3
      %p53 = por %p51, %p52
      %p54 = scmp.ne.s32.totalorder %s46, %s49
      %p55 = scmp.eq.s32.totalorder %s13, 0
      %p56 = por %p54, %p55
      %p57 = scmp.ne.s32.totalorder %s46, %s49
      %p58 = scmp.eq.s32.totalorder %s18, 3
      %p59 = por %p57, %p58
      %p60 = scmp.ne.s32.totalorder %s49, %s50
      %p61 = scmp.eq.s32.totalorder %s18, 0
      %p62 = por %p60, %p61
      %p63 = scmp.ne.s32.totalorder %s49, %s50
      %p64 = scmp.eq.s32.totalorder %s19, 3
      %p65 = por %p63, %p64
      %p67 = scmp.ne.s32.totalorder %s50, %s66
      %p68 = scmp.eq.s32.totalorder %s19, 0
      %p69 = por %p67, %p68
      %s70 = ssub.s32 %s20, %s39
      %s71 = ssub.s32 %s21, %s35
      %s72 = sor.u32 %s70, %s71
      %s73 = ssub.s32 %s22, %s31
      %s74 = sor.u32 %s72, %s73
      %p75 = scmp.eq.s32.totalorder %s74, 0
      %s77 = sadd.s32 %s76, 1
      %s78 = scalar_select %p75, %s76, %s77
      %p81 = pneg %p75
      %p82 = scmp.eq.s32.totalorder %s13, 3
      %p83 = por %p81, %p82
      %p84 = scmp.ne.s32.totalorder %s76, %s79
      %p85 = scmp.eq.s32.totalorder %s13, 0
      %p86 = por %p84, %p85
      %p87 = scmp.ne.s32.totalorder %s76, %s79
      %p88 = scmp.eq.s32.totalorder %s18, 3
      %p89 = por %p87, %p88
      %p90 = scmp.ne.s32.totalorder %s79, %s80
      %p91 = scmp.eq.s32.totalorder %s18, 0
      %p92 = por %p90, %p91
      %p93 = scmp.ne.s32.totalorder %s79, %s80
      %p94 = scmp.eq.s32.totalorder %s19, 3
      %p95 = por %p93, %p94
      %p97 = scmp.ne.s32.totalorder %s80, %s96
      %p98 = scmp.eq.s32.totalorder %s19, 0
      %p99 = por %p97, %p98
      %p100 = scmp.le.s32.totalorder 1, %s13
      %p101 = scmp.lt.s32.totalorder %s13, 5
      %p102 = pnand %p100, %p101
      %p103 = pneg %p102
      // Predicated region
      $region9: #{tpu_custom_call.1} parent=5 // pred_check
        _
      $region10: #{tpu_custom_call.1} parent=5 // pred_check_branch
        %105 = sbr.rel (%p102) target = $region12
      $region11: #{tpu_custom_call.1} parent=5 // pred_region
        %s106 = ssub.s32 %s13, 1
      $region12: #{tpu_custom_call.1} parent=5 // pred_fallthru
        _
      %p107 = scmp.lt.s32.totalorder %s13, 4
      // Predicated region
      $region13: #{tpu_custom_call.1} parent=5 // pred_check
        %p108 = pneg %p107
      $region14: #{tpu_custom_call.1} parent=5 // pred_check_branch
        %110 = sbr.rel (%p108) target = $region16
      $region15: #{tpu_custom_call.1} parent=5 // pred_region
        // Predicated region
        $region17: #{tpu_custom_call.1} parent=15 // pred_check
          %p111 = pneg %p56
        $region18: #{tpu_custom_call.1} parent=15 // pred_check_branch
          %113 = sbr.rel (%p111) target = $region20
        $region19: #{tpu_custom_call.1} parent=15 // pred_region
          %s114 = sand.u32 %s46, 1
          %s115 = scalar_lea.sflag [#allocation3], %s114
          %s116 = sand.u32 %s46, 1
          %s117 = smul.addr %s116, 32
          %s118 = scalar_lea.vmem [#allocation2], %s117
          %120 = vsyncadd %s115, 0
          %s121 = sadd.s32 %s22, %s21
          %s122 = smul.addr %s20, 8
          %s123 = sadd.s32 %s121, %s122
          %s124 = smul.addr %s123, 8
          %s125 = scalar_lea.hbm %s0, %s124
          %s126 = sshll.u32 %s125, 4
          %s127 = int_to_ptr.hbm [resolvable:$true] %s126
          %s128 = sshll.u32 %s118, 4
          %s129 = int_to_ptr.vmem [resolvable:$true] %s128
          %134 = dma.hbm_to_vmem [thread:$0]  %s127, 512, %s129, %s115, 256, 128, 8
        $region20: #{tpu_custom_call.1} parent=15 // pred_fallthru
          _
      $region16: #{tpu_custom_call.1} parent=5 // pred_fallthru
        _
      %p135 = scmp.le.s32.totalorder 1, %s13
      %p136 = scmp.lt.s32.totalorder %s13, 5
      %p137 = pnand %p135, %p136
      %p138 = pneg %p137
      // Predicated region
      $region21: #{tpu_custom_call.1} parent=5 // pred_check
        _
      $region22: #{tpu_custom_call.1} parent=5 // pred_check_branch
        %140 = sbr.rel (%p137) target = $region24
      $region23: #{tpu_custom_call.1} parent=5 // pred_region
        %s141 = ssub.s32 %s13, 1
        %s142 = sand.u32 %s49, 1
        %s143 = scalar_lea.sflag [#allocation3], %s142
        %s144 = sand.u32 %s49, 1
        %s145 = smul.addr %s144, 32
        %s146 = scalar_lea.vmem [#allocation2], %s145
        // Predicated region
        $region25: #{tpu_custom_call.1} parent=23 // pred_check
          %p147 = pneg %p62
        $region26: #{tpu_custom_call.1} parent=23 // pred_check_branch
          %149 = sbr.rel (%p147) target = $region28
        $region27: #{tpu_custom_call.1} parent=23 // pred_region
          %151 = dma.done %s143, 512
        $region28: #{tpu_custom_call.1} parent=23 // pred_fallthru
          _
        %s152 = sand.u32 %s49, 1
        %s153 = scalar_lea.sflag [#allocation3], %s152
        %s154 = sand.u32 %s49, 1
        %s155 = smul.addr %s154, 32
        %s156 = scalar_lea.vmem [#allocation2], %s155
        %p157 = pneg %p62
        %p158 = pneg %p59
        %p159 = pneg %p92
        %p160 = pneg %p89
        %s161 = sand.u32 %s79, 1
        %s162 = scalar_lea.sflag [#allocation4], %s161
        %s163 = sand.u32 %s79, 1
        %s164 = smul.addr %s163, 8
        %s165 = scalar_lea.vmem [#allocation5], %s164
        %s166 = scalar_lea.vmem %s146, 8 [#allocation2]
        %v167 = vld [vmem:[%s166] sm:$0xff]
        %v168 = vadd.f32 %v167, 0.0
        %s169 = scalar_lea.vmem %s146, 16 [#allocation2]
        %v170 = vld [vmem:[%s169] sm:$0xff]
        %v171 = vmul.f32 %v170, 2.0
        %v172 = vadd.f32 %v168, %v171
        %s173 = scalar_lea.vmem %s146, 24 [#allocation2]
        %v174 = vld [vmem:[%s173] sm:$0xff]
        %v175 = vmul.f32 %v174, 3.0
        %v176 = vadd.f32 %v172, %v175
        %177 = vst [vmem:[%s165] sm:$0xff] %v176
        %s178 = sand.u32 %s79, 1
        %s179 = scalar_lea.sflag [#allocation4], %s178
        %s180 = sand.u32 %s79, 1
        %s181 = smul.addr %s180, 8
        %s182 = scalar_lea.vmem [#allocation5], %s181
        // Predicated region
        $region29: #{tpu_custom_call.1} parent=23 // pred_check
          %p183 = pneg %p89
        $region30: #{tpu_custom_call.1} parent=23 // pred_check_branch
          %185 = sbr.rel (%p183) target = $region32
        $region31: #{tpu_custom_call.1} parent=23 // pred_region
          %187 = vsyncadd %s179, 0
          %s188 = sadd.s32 %s25, %s24
          %s189 = smul.addr %s23, 2
          %s190 = sadd.s32 %s188, %s189
          %s191 = smul.addr %s190, 8
          %s192 = scalar_lea.hbm %s1, %s191
          %s194 = sshll.u32 %s182, 4
          %s195 = int_to_ptr.vmem [resolvable:$true] %s194
          %s196 = sshll.u32 %s192, 4
          %s197 = int_to_ptr.hbm [resolvable:$true] %s196
          %199 = dma.vmem_to_hbm [thread:$0]  %s195, 128, %s197, %s179
        $region32: #{tpu_custom_call.1} parent=23 // pred_fallthru
          _
      $region24: #{tpu_custom_call.1} parent=5 // pred_fallthru
        _
      %p200 = scmp.le.s32.totalorder 2, %s13
      // Predicated region
      $region33: #{tpu_custom_call.1} parent=5 // pred_check
        %p201 = pneg %p200
      $region34: #{tpu_custom_call.1} parent=5 // pred_check_branch
        %203 = sbr.rel (%p201) target = $region36
      $region35: #{tpu_custom_call.1} parent=5 // pred_region
        %s204 = ssub.s32 %s13, 2
        // Predicated region
        $region37: #{tpu_custom_call.1} parent=35 // pred_check
          %p205 = pneg %p95
        $region38: #{tpu_custom_call.1} parent=35 // pred_check_branch
          %207 = sbr.rel (%p205) target = $region40
        $region39: #{tpu_custom_call.1} parent=35 // pred_region
          %s208 = sand.u32 %s80, 1
          %s209 = scalar_lea.sflag [#allocation4], %s208
          %s210 = sand.u32 %s80, 1
          %s211 = smul.addr %s210, 8
          %s212 = scalar_lea.vmem [#allocation5], %s211
          %214 = dma.done %s209, 128
        $region40: #{tpu_custom_call.1} parent=35 // pred_fallthru
          _
      $region36: #{tpu_custom_call.1} parent=5 // pred_fallthru
        _
    $region6: #{tpu_custom_call.1} parent=1 // loop_footer
      %s17 = sadd.s32 1, %s13
    $region7: #{tpu_custom_call.1} parent=1 // loop_footer_branch
      %12 = sbr.rel target = $region3
    $region8: #{tpu_custom_call.1} parent=1 // loop_exit
      _
    %215 = vsyncpa [#allocation3], 1
    %s216 = scalar_lea.sflag [#allocation3], 1
    %217 = vsyncpa %s216, 1
    %218 = vsyncpa [#allocation4], 1
    %s219 = scalar_lea.sflag [#allocation4], 1
    %220 = vsyncpa %s219, 1

</llo_original>
